<compile_context>
chip_gen: v6e
topology: v6e:2x2x1
jax: 0.10.0
libtpu: 0.0.40
codegen_flags: <defaults>
</compile_context>

<pallas_src>
import functools

import jax
import jax.numpy as jnp
from jax import lax
from jax.experimental import pallas as pl
from jax.experimental.pallas import tpu as pltpu


# ----------------------------------------------------------------------------
# Helpers: generation-aware VMEM limit and lane-block selection
# ----------------------------------------------------------------------------
def _round_up(x, m):
    return (x + m - 1) // m * m


def _vmem_limit_bytes():
    try:
        cap = int(pltpu.get_tpu_info().vmem_capacity_bytes)
    except Exception:                       # conservative fallback = v7x per-TC VMEM
        cap = 64 * 1024 * 1024
    # v5e/v6e (128 MiB physical): 64 MiB scoped; v7x (64 MiB physical): 32 MiB scoped.
    return min(cap // 2, 64 * 1024 * 1024)


def _pick_lane_block(total_lanes, per_lane_bytes, fixed_bytes, budget_bytes, batch,
                     max_lanes=8192):
    """Largest 128-multiple divisor of `total_lanes` (itself a multiple of 128) whose
    double-buffered working set fits `budget_bytes`, capped at `max_lanes` lanes.
    If the best choice leaves an odd parallel grid extent, fall back to a >=half-size
    tile that makes it even (keeps both v7x TensorCores busy; harmless on v5e/v6e)."""
    cap = (budget_bytes - fixed_bytes) // max(per_lane_bytes, 1)
    cap = max(128, min(cap, max_lanes, total_lanes))
    k = total_lanes // 128
    cands = sorted((128 * d for d in range(1, k + 1) if k % d == 0 and 128 * d <= cap),
                   reverse=True)
    if not cands:
        cands = [128]
    best = cands[0]
    if (batch * (total_lanes // best)) % 2 == 1:
        for lb in cands[1:]:
            if 2 * lb >= best and (batch * (total_lanes // lb)) % 2 == 0:
                return lb
    return best


# ----------------------------------------------------------------------------
# Kernel: 4-phase transposed conv = one MXU matmul, with fused BN statistics
# ----------------------------------------------------------------------------
def _convt_phase_kernel(x_ref, w_ref, y_ref, ssum_ref, ssq_ref):
    # x_ref : (1, 4*Cin, LB)   bf16/f32  four shifted input copies, spatial in lanes
    # w_ref : (4*Cout, 4*Cin)  bf16/f32  phase/shift tap matrix
    # y_ref : (1, 4*Cout, LB)  f32       phase-major, bias-free conv output
    # ssum_ref / ssq_ref : (1, 1, 4*Cout, 1) f32 per-block partial sums for BN stats
    y = jnp.dot(w_ref[...], x_ref[0], preferred_element_type=jnp.float32)
    y_ref[0] = y
    ssum_ref[0, 0] = jnp.sum(y, axis=1, keepdims=True)
    ssq_ref[0, 0] = jnp.sum(y * y, axis=1, keepdims=True)


# ----------------------------------------------------------------------------
# Weight preparation: ConvTranspose2d (Cin, Cout, 3, 3) -> (4*Cout, 4*Cin)
# ----------------------------------------------------------------------------
def _phase_weight_matrix(w_t):
    """Row block p = 2*py + px (output parity), column block s = 2*sy + sx (input shift).
    ky(py, sy): (0,0)->1, (1,0)->2, (1,1)->0, (0,1)->unused (zero block); same for kx."""
    Cin, Cout = w_t.shape[0], w_t.shape[1]
    w_t = w_t.astype(jnp.float32)

    def k_idx(p, s):
        if p == 0 and s == 0:
            return 1
        if p == 1 and s == 0:
            return 2
        if p == 1 and s == 1:
            return 0
        return None

    rows = []
    for py in (0, 1):
        for px in (0, 1):
            cols = []
            for sy in (0, 1):
                for sx in (0, 1):
                    ky, kx = k_idx(py, sy), k_idx(px, sx)
                    if ky is None or kx is None:
                        cols.append(jnp.zeros((Cout, Cin), jnp.float32))
                    else:
                        cols.append(w_t[:, :, ky, kx].T)          # (Cout, Cin)
            rows.append(jnp.concatenate(cols, axis=1))            # (Cout, 4*Cin)
    return jnp.concatenate(rows, axis=0)                          # (4*Cout, 4*Cin)


# ----------------------------------------------------------------------------
# Wrapper
# ----------------------------------------------------------------------------
def upsampler_block(x_nchw, w_t, bias, gamma, beta, eps=1e-3,
                    compute_dtype=jnp.bfloat16):
    """NCHW in / NCHW (f32) out.  w_t is the PyTorch ConvTranspose2d weight (Cin, Cout, 3, 3).

    Training-mode BatchNorm (batch statistics), matching the PyTorch module's forward.
    Note: the conv bias cancels exactly through the batch-mean subtraction, so `bias`
    never touches the big tensors (eval-mode running-stat BN is NOT implemented here)."""
    del bias  # folded away by training-mode BN (see note above)
    N, Cin, H, W = x_nchw.shape
    Cout = w_t.shape[1]
    H2, W2 = 2 * H, 2 * W
    HW = H * W
    HWp = _round_up(HW, 128)              # pad the lane axis once -> 128-aligned blocks

    # Four shifted input copies (sy, sx) in {0,1}^2, zero-padded bottom/right, concatenated
    # on the channel axis, flattened spatially and lane-padded.  Built in `compute_dtype`
    # (default bf16) so the duplicated stream costs half the HBM bytes.
    x = x_nchw.astype(compute_dtype)
    xp = jnp.pad(x, ((0, 0), (0, 0), (0, 1), (0, 1)))
    xcat = jnp.concatenate(
        [xp[:, :, sy:sy + H, sx:sx + W] for sy in (0, 1) for sx in (0, 1)], axis=1)
    xcat = xcat.reshape(N, 4 * Cin, HW)
    if HWp != HW:
        xcat = jnp.pad(xcat, ((0, 0), (0, 0), (0, HWp - HW)))     # zero lanes -> zero output

    wcat = _phase_weight_matrix(w_t).astype(compute_dtype)        # (4*Cout, 4*Cin)

    # Generation-aware tiling / VMEM limit.
    in_bytes = jnp.dtype(compute_dtype).itemsize
    vmem_limit = _vmem_limit_bytes()
    per_lane = 2 * (4 * Cin * in_bytes + 4 * Cout * 4)            # double-buffered in + out
    fixed = 2 * (4 * Cout) * (4 * Cin) * in_bytes + (1 << 16)     # weights + stats + slack
    LB = _pick_lane_block(HWp, per_lane, fixed, vmem_limit // 2, N)
    nL = HWp // LB

    cparams = pltpu.CompilerParams(
        dimension_semantics=("parallel", "parallel"),
        vmem_limit_bytes=vmem_limit)

    ycat, ssum, ssq = pl.pallas_call(
        _convt_phase_kernel,
        out_shape=(
            jax.ShapeDtypeStruct((N, 4 * Cout, HWp), jnp.float32),
            jax.ShapeDtypeStruct((N, nL, 4 * Cout, 1), jnp.float32),
            jax.ShapeDtypeStruct((N, nL, 4 * Cout, 1), jnp.float32),
        ),
        grid=(N, nL),
        in_specs=[
            pl.BlockSpec((1, 4 * Cin, LB), lambda n, l: (n, 0, l)),
            pl.BlockSpec((4 * Cout, 4 * Cin), lambda n, l: (0, 0)),
        ],
        out_specs=(
            pl.BlockSpec((1, 4 * Cout, LB), lambda n, l: (n, 0, l)),
            pl.BlockSpec((1, 1, 4 * Cout, 1), lambda n, l: (n, l, 0, 0)),
            pl.BlockSpec((1, 1, 4 * Cout, 1), lambda n, l: (n, l, 0, 0)),
        ),
        compiler_params=cparams,
    )(xcat, wcat)

    # BatchNorm2d training-mode statistics (biased variance) -> per-channel scale/shift.
    # Padded lanes contribute exactly zero to ssum/ssq; `cnt` uses the true element count.
    cnt = jnp.float32(N * 4 * HW)                                 # = N * H2 * W2
    s1 = ssum.reshape(N, nL, 4, Cout).sum(axis=(0, 1, 2))
    s2 = ssq.reshape(N, nL, 4, Cout).sum(axis=(0, 1, 2))
    mean0 = s1 / cnt                                              # mean of bias-free conv output
    var = jnp.maximum(s2 / cnt - mean0 * mean0, 0.0)              # biased variance (bias-invariant)
    # TODO(synk): if |mean| >> std in production, accumulate sum((y - c)^2) around a cheap
    # per-channel pre-shift instead of E[y^2]-E[y]^2 to avoid f32 cancellation.
    inv = gamma.astype(jnp.float32) * lax.rsqrt(var + jnp.float32(eps))
    scale = inv.reshape(1, Cout, 1, 1)
    shift = (beta.astype(jnp.float32) - mean0 * inv).reshape(1, Cout, 1, 1)

    # Phase-major -> NCHW interleave; XLA fuses the BN affine + ReLU6 into this single copy,
    # so the 2x-upsampled tensor is read and written exactly once here.
    y = ycat[:, :, :HW].reshape(N, 2, 2, Cout, H, W)
    y = jnp.transpose(y, (0, 3, 4, 1, 5, 2)).reshape(N, Cout, H2, W2)
    return jnp.clip(y * scale + shift, 0.0, 6.0)


# ----------------------------------------------------------------------------
# Pure-JAX reference (XLA conv) for correctness checking
# ----------------------------------------------------------------------------
def upsampler_block_ref(x_nchw, w_t, bias, gamma, beta, eps=1e-3):
    Cout = w_t.shape[1]
    w_conv = jnp.transpose(jnp.flip(w_t, axis=(2, 3)), (1, 0, 2, 3))  # OIHW
    y = lax.conv_general_dilated(
        x_nchw, w_conv, window_strides=(1, 1),
        padding=((1, 2), (1, 2)), lhs_dilation=(2, 2),
        dimension_numbers=("NCHW", "OIHW", "NCHW"))
    y = y + bias.reshape(1, Cout, 1, 1)
    mean = jnp.mean(y, axis=(0, 2, 3), keepdims=True)
    var = jnp.var(y, axis=(0, 2, 3), keepdims=True)
    y = (y - mean) / jnp.sqrt(var + eps)
    y = y * gamma.reshape(1, Cout, 1, 1) + beta.reshape(1, Cout, 1, 1)
    return jnp.clip(y, 0.0, 6.0)


if __name__ == "__main__":
    key = jax.random.PRNGKey(0)

    def make_inputs(k, N, Cin, Cout, H, W):
        k1, k2, k3, k4, k5 = jax.random.split(k, 5)
        x = jax.random.normal(k1, (N, Cin, H, W), jnp.float32)
        w_t = 0.1 * jax.random.normal(k2, (Cin, Cout, 3, 3), jnp.float32)
        bias = 0.1 * jax.random.normal(k3, (Cout,), jnp.float32)
        gamma = 1.0 + 0.1 * jax.random.normal(k4, (Cout,), jnp.float32)
        beta = 0.1 * jax.random.normal(k5, (Cout,), jnp.float32)
        return x, w_t, bias, gamma, beta

    run_f32 = jax.jit(functools.partial(upsampler_block, compute_dtype=jnp.float32))
    run_bf16 = jax.jit(upsampler_block)     # default fast path: bf16 streams, f32 accumulation

    # Second shape exercises the non-128-divisible H*W (lane padding) and odd channel counts.
    for idx, (N, Cin, Cout, H, W) in enumerate(((2, 4, 8, 16, 16), (1, 3, 5, 10, 10))):
        x, w_t, bias, gamma, beta = make_inputs(jax.random.fold_in(key, idx), N, Cin, Cout, H, W)
        ref = upsampler_block_ref(x, w_t, bias, gamma, beta)

        # f32 path: tight tolerance against the exact reference.
        out = jax.block_until_ready(run_f32(x, w_t, bias, gamma, beta))
        assert out.shape == (N, Cout, 2 * H, 2 * W), out.shape
        assert bool(jnp.all(jnp.isfinite(out)))
        err = float(jnp.max(jnp.abs(out - ref)))
        assert bool(jnp.allclose(out, ref, rtol=1e-3, atol=1e-3)), ("f32", (N, Cin, Cout, H, W), err)

        # bf16-stream path: compare against the reference evaluated on bf16-rounded inputs
        # (isolates kernel correctness from the deliberate precision reduction of the fast path).
        xq = x.astype(jnp.bfloat16).astype(jnp.float32)
        wq = w_t.astype(jnp.bfloat16).astype(jnp.float32)
        ref_q = upsampler_block_ref(xq, wq, bias, gamma, beta)
        out_b = jax.block_until_ready(run_bf16(x, w_t, bias, gamma, beta))
        assert bool(jnp.all(jnp.isfinite(out_b)))
        err_b = float(jnp.max(jnp.abs(out_b - ref_q)))
        assert bool(jnp.allclose(out_b, ref_q, rtol=5e-3, atol=5e-3)), ("bf16", (N, Cin, Cout, H, W), err_b)

    print("KERNEL_OK")
</pallas_src>

<mosaic_0001>
module attributes {stable_mosaic.version = 11 : i64} {
  func.func @_convt_phase_kernel(%arg0: i32, %arg1: i32, %arg2: memref<1x16x256xf32, #tpu.memory_space<vmem>>, %arg3: memref<32x16xf32, #tpu.memory_space<vmem>>, %arg4: memref<1x32x256xf32, #tpu.memory_space<vmem>>, %arg5: memref<1x1x32x1xf32, #tpu.memory_space<vmem>>, %arg6: memref<1x1x32x1xf32, #tpu.memory_space<vmem>>) attributes {dimension_semantics = [#tpu.dimension_semantics<parallel>, #tpu.dimension_semantics<parallel>], iteration_bounds = array<i64: 2, 1>, scalar_prefetch = 0 : i64, scratch_operands = 0 : i64, tpu.core_type = #tpu.core_type<tc>, window_params = [{transform_indices = @transform_0, window_bounds = array<i64: 1, 16, 256>}, {pipeline_mode = #tpu.pipeline_mode<synchronous>, transform_indices = @transform_1, window_bounds = array<i64: 32, 16>}, {transform_indices = @transform_2, window_bounds = array<i64: 1, 32, 256>}, {transform_indices = @transform_3, window_bounds = array<i64: 1, 1, 32, 1>}, {transform_indices = @transform_4, window_bounds = array<i64: 1, 1, 32, 1>}]} {
    %c0 = arith.constant 0 : index
    %c0_0 = arith.constant 0 : index
    %0 = vector.load %arg3[%c0, %c0_0] : memref<32x16xf32, #tpu.memory_space<vmem>>, vector<32x16xf32>
    %c0_1 = arith.constant 0 : index
    %c0_2 = arith.constant 0 : index
    %c0_3 = arith.constant 0 : index
    %1 = vector.load %arg2[%c0_1, %c0_2, %c0_3] : memref<1x16x256xf32, #tpu.memory_space<vmem>>, vector<1x16x256xf32>
    %2 = vector.shape_cast %1 : vector<1x16x256xf32> to vector<16x256xf32>
    %cst = arith.constant dense<0.000000e+00> : vector<32x256xf32>
    %3 = tpu.matmul %0, %2, %cst {dimension_numbers = #tpu.dot_dimension_numbers<[1], [0], [0], [1], [0, 0, 1, 1], [], []>} : vector<32x16xf32>, vector<16x256xf32>, vector<32x256xf32> -> vector<32x256xf32>
    %c0_4 = arith.constant 0 : index
    %c0_5 = arith.constant 0 : index
    %c0_6 = arith.constant 0 : index
    %4 = vector.load %arg4[%c0_4, %c0_5, %c0_6] : memref<1x32x256xf32, #tpu.memory_space<vmem>>, vector<1x32x256xf32>
    %5 = vector.shape_cast %4 : vector<1x32x256xf32> to vector<32x256xf32>
    %6 = vector.shape_cast %3 : vector<32x256xf32> to vector<1x32x256xf32>
    tpu.vector_store %arg4[%c0_4, %c0_5, %c0_6], %6 {strides = array<i32>} : memref<1x32x256xf32, #tpu.memory_space<vmem>>, vector<1x32x256xf32>,
    %cst_7 = arith.constant dense<0.000000e+00> : vector<32xf32>
    %7 = vector.multi_reduction <add>, %3, %cst_7 [1] : vector<32x256xf32> to vector<32xf32>
    %8 = vector.shape_cast %7 : vector<32xf32> to vector<32x1xf32>
    %c0_8 = arith.constant 0 : index
    %c0_9 = arith.constant 0 : index
    %c0_10 = arith.constant 0 : index
    %c0_11 = arith.constant 0 : index
    %9 = vector.load %arg5[%c0_8, %c0_9, %c0_10, %c0_11] : memref<1x1x32x1xf32, #tpu.memory_space<vmem>>, vector<1x1x32x1xf32>
    %10 = vector.shape_cast %9 : vector<1x1x32x1xf32> to vector<32x1xf32>
    %11 = vector.shape_cast %8 : vector<32x1xf32> to vector<1x1x32x1xf32>
    tpu.vector_store %arg5[%c0_8, %c0_9, %c0_10, %c0_11], %11 {strides = array<i32>} : memref<1x1x32x1xf32, #tpu.memory_space<vmem>>, vector<1x1x32x1xf32>,
    %12 = arith.mulf %3, %3 : vector<32x256xf32>
    %cst_12 = arith.constant dense<0.000000e+00> : vector<32xf32>
    %13 = vector.multi_reduction <add>, %12, %cst_12 [1] : vector<32x256xf32> to vector<32xf32>
    %14 = vector.shape_cast %13 : vector<32xf32> to vector<32x1xf32>
    %c0_13 = arith.constant 0 : index
    %c0_14 = arith.constant 0 : index
    %c0_15 = arith.constant 0 : index
    %c0_16 = arith.constant 0 : index
    %15 = vector.load %arg6[%c0_13, %c0_14, %c0_15, %c0_16] : memref<1x1x32x1xf32, #tpu.memory_space<vmem>>, vector<1x1x32x1xf32>
    %16 = vector.shape_cast %15 : vector<1x1x32x1xf32> to vector<32x1xf32>
    %17 = vector.shape_cast %14 : vector<32x1xf32> to vector<1x1x32x1xf32>
    tpu.vector_store %arg6[%c0_13, %c0_14, %c0_15, %c0_16], %17 {strides = array<i32>} : memref<1x1x32x1xf32, #tpu.memory_space<vmem>>, vector<1x1x32x1xf32>,
    return
  }
  func.func @transform_0(%arg0: i32, %arg1: i32) -> (i32, i32, i32) {
    %c0_i32 = arith.constant 0 : i32
    %c0_i32_0 = arith.constant 0 : i32
    return %arg0, %c0_i32, %arg1 : i32, i32, i32
  }
  func.func @transform_1(%arg0: i32, %arg1: i32) -> (i32, i32) {
    %c0_i32 = arith.constant 0 : i32
    %c0_i32_0 = arith.constant 0 : i32
    %c0_i32_1 = arith.constant 0 : i32
    return %c0_i32, %c0_i32_0 : i32, i32
  }
  func.func @transform_2(%arg0: i32, %arg1: i32) -> (i32, i32, i32) {
    %c0_i32 = arith.constant 0 : i32
    %c0_i32_0 = arith.constant 0 : i32
    return %arg0, %c0_i32, %arg1 : i32, i32, i32
  }
  func.func @transform_3(%arg0: i32, %arg1: i32) -> (i32, i32, i32, i32) {
    %c0_i32 = arith.constant 0 : i32
    %c0_i32_0 = arith.constant 0 : i32
    %c0_i32_1 = arith.constant 0 : i32
    return %arg0, %arg1, %c0_i32, %c0_i32_0 : i32, i32, i32, i32
  }
  func.func @transform_4(%arg0: i32, %arg1: i32) -> (i32, i32, i32, i32) {
    %c0_i32 = arith.constant 0 : i32
    %c0_i32_0 = arith.constant 0 : i32
    %c0_i32_1 = arith.constant 0 : i32
    return %arg0, %arg1, %c0_i32, %c0_i32_0 : i32, i32, i32, i32
  }
}

</mosaic_0001>

<llo_original>
// kernel: upsampler_block.1
$region0: #{upsampler_block.1}
  #allocation0 [shape = 'u32[]', space=smem, size = 0x4, offset = 0x4, fixed_abs, tag = 'smem constant byte address 0x4 - core index']
  #allocation1 [shape = 'u32[144,128]{1,0:T(1,128)}', space=vmem, size = 0x12000, scoped, tag = 'internal scratch']
  %s0 = inlined_call_operand.vmem [shape: f32[2,16,256], index: 0, kind: input, shape index: {}]
  %s1 = inlined_call_operand.vmem [shape: f32[32,16], index: 1, kind: input, shape index: {}]
  %s2 = inlined_call_operand.vmem [shape: f32[2,32,256], index: 2, kind: output, shape index: {0}]
  %s3 = inlined_call_operand.vmem [shape: f32[2,1,32,1], index: 3, kind: output, shape index: {1}]
  %s4 = inlined_call_operand.vmem [shape: f32[2,1,32,1], index: 4, kind: output, shape index: {2}]
  %5 = xla_tuple %s2, %s3, %s4
  %s6 = sld [smem:[#allocation0]]
  $region57: #{upsampler_block.1} parent=0
    _
  %s8 = ssub.s32 1, %s6
  %s9 = scalar_select 0, %s8, %s6
  loop: start=0, step=1, limit=4
  $region2: #{upsampler_block.1} parent=0 // loop_pre_header
    _
  $region3: #{upsampler_block.1} parent=0 // loop_header
    %s11 = sphi 0, %s15
    %p12 = scmp.ge.s32.totalorder %s11, 4
    %s18 = sphi 0, %s30
    %s19 = sphi 0, %s26
    %s20 = sphi 0, %s18
    %s21 = sphi 0, %s19
    %s22 = sphi 0, %s20
    %s23 = sphi 0, %s21
    %s35 = sphi 0, %s37
    %s38 = sphi 0, %s35
    %s39 = sphi 0, %s38
    %s55 = sphi 0, %s39
    %s59 = sphi 0, %s59
    %s61 = sphi 0, %s59
    %s62 = sphi 0, %s61
    %s76 = sphi 0, %s62
    %s84 = sphi 0, %s86
    %s87 = sphi 0, %s84
    %s88 = sphi 0, %s87
    %s104 = sphi 0, %s88
    %s112 = sphi 0, %s114
    %s115 = sphi 0, %s112
    %s116 = sphi 0, %s115
    %s132 = sphi 0, %s116
    %s140 = sphi 0, %s142
    %s143 = sphi 0, %s140
    %s144 = sphi 0, %s143
    %s160 = sphi 0, %s144
  $region4: #{upsampler_block.1} parent=0 // loop_header_branch
    %14 = sbr.rel (%p12) target = $region8
  $region5: #{upsampler_block.1} parent=0 // loop_body
    %s16 = ssub.s32 %s11, 1
    %s17 = ssub.s32 %s11, 2
    %s24 = sadd.s32 1, %s19
    %p25 = scmp.ge.s32.totalorder %s24, 1
    %s26 = scalar_select %p25, 0, %s24
    %s27 = sadd.s32 1, %s18
    %s28 = scalar_select %p25, %s27, %s18
    %p29 = scmp.ge.s32.totalorder %s28, 2
    %s30 = scalar_select %p29, 0, %s28
    %s31 = ssub.s32 %s18, %s30
    %s32 = ssub.s32 %s19, %s26
    %s33 = sor.u32 %s31, %s32
    %p34 = scmp.eq.s32.totalorder %s33, 0
    %s36 = sadd.s32 %s35, 1
    %s37 = scalar_select %p34, %s35, %s36
    %p40 = pneg %p34
    %p41 = scmp.eq.s32.totalorder %s11, 1
    %p42 = por %p40, %p41
    %p43 = scmp.ne.s32.totalorder %s35, %s38
    %p44 = scmp.eq.s32.totalorder %s11, 0
    %p45 = por %p43, %p44
    %p46 = scmp.ne.s32.totalorder %s35, %s38
    %p47 = scmp.eq.s32.totalorder %s16, 1
    %p48 = por %p46, %p47
    %p49 = scmp.ne.s32.totalorder %s38, %s39
    %p50 = scmp.eq.s32.totalorder %s16, 0
    %p51 = por %p49, %p50
    %p52 = scmp.ne.s32.totalorder %s38, %s39
    %p53 = scmp.eq.s32.totalorder %s17, 1
    %p54 = por %p52, %p53
    %p56 = scmp.ne.s32.totalorder %s39, %s55
    %p57 = scmp.eq.s32.totalorder %s17, 0
    %p58 = por %p56, %p57
    %s60 = sadd.s32 %s59, 1
    %p63 = scmp.eq.s32.totalorder %s11, 1
    %p64 = scmp.ne.s32.totalorder %s59, %s61
    %p65 = scmp.eq.s32.totalorder %s11, 0
    %p66 = por %p64, %p65
    %p67 = scmp.ne.s32.totalorder %s59, %s61
    %p68 = scmp.eq.s32.totalorder %s16, 1
    %p69 = por %p67, %p68
    %p70 = scmp.ne.s32.totalorder %s61, %s62
    %p71 = scmp.eq.s32.totalorder %s16, 0
    %p72 = por %p70, %p71
    %p73 = scmp.ne.s32.totalorder %s61, %s62
    %p74 = scmp.eq.s32.totalorder %s17, 1
    %p75 = por %p73, %p74
    %p77 = scmp.ne.s32.totalorder %s62, %s76
    %p78 = scmp.eq.s32.totalorder %s17, 0
    %p79 = por %p77, %p78
    %s80 = ssub.s32 %s18, %s30
    %s81 = ssub.s32 %s19, %s26
    %s82 = sor.u32 %s80, %s81
    %p83 = scmp.eq.s32.totalorder %s82, 0
    %s85 = sadd.s32 %s84, 1
    %s86 = scalar_select %p83, %s84, %s85
    %p89 = pneg %p83
    %p90 = scmp.eq.s32.totalorder %s11, 1
    %p91 = por %p89, %p90
    %p92 = scmp.ne.s32.totalorder %s84, %s87
    %p93 = scmp.eq.s32.totalorder %s11, 0
    %p94 = por %p92, %p93
    %p95 = scmp.ne.s32.totalorder %s84, %s87
    %p96 = scmp.eq.s32.totalorder %s16, 1
    %p97 = por %p95, %p96
    %p98 = scmp.ne.s32.totalorder %s87, %s88
    %p99 = scmp.eq.s32.totalorder %s16, 0
    %p100 = por %p98, %p99
    %p101 = scmp.ne.s32.totalorder %s87, %s88
    %p102 = scmp.eq.s32.totalorder %s17, 1
    %p103 = por %p101, %p102
    %p105 = scmp.ne.s32.totalorder %s88, %s104
    %p106 = scmp.eq.s32.totalorder %s17, 0
    %p107 = por %p105, %p106
    %s108 = ssub.s32 %s18, %s30
    %s109 = ssub.s32 %s19, %s26
    %s110 = sor.u32 %s108, %s109
    %p111 = scmp.eq.s32.totalorder %s110, 0
    %s113 = sadd.s32 %s112, 1
    %s114 = scalar_select %p111, %s112, %s113
    %p117 = pneg %p111
    %p118 = scmp.eq.s32.totalorder %s11, 1
    %p119 = por %p117, %p118
    %p120 = scmp.ne.s32.totalorder %s112, %s115
    %p121 = scmp.eq.s32.totalorder %s11, 0
    %p122 = por %p120, %p121
    %p123 = scmp.ne.s32.totalorder %s112, %s115
    %p124 = scmp.eq.s32.totalorder %s16, 1
    %p125 = por %p123, %p124
    %p126 = scmp.ne.s32.totalorder %s115, %s116
    %p127 = scmp.eq.s32.totalorder %s16, 0
    %p128 = por %p126, %p127
    %p129 = scmp.ne.s32.totalorder %s115, %s116
    %p130 = scmp.eq.s32.totalorder %s17, 1
    %p131 = por %p129, %p130
    %p133 = scmp.ne.s32.totalorder %s116, %s132
    %p134 = scmp.eq.s32.totalorder %s17, 0
    %p135 = por %p133, %p134
    %s136 = ssub.s32 %s18, %s30
    %s137 = ssub.s32 %s19, %s26
    %s138 = sor.u32 %s136, %s137
    %p139 = scmp.eq.s32.totalorder %s138, 0
    %s141 = sadd.s32 %s140, 1
    %s142 = scalar_select %p139, %s140, %s141
    %p145 = pneg %p139
    %p146 = scmp.eq.s32.totalorder %s11, 1
    %p147 = por %p145, %p146
    %p148 = scmp.ne.s32.totalorder %s140, %s143
    %p149 = scmp.eq.s32.totalorder %s11, 0
    %p150 = por %p148, %p149
    %p151 = scmp.ne.s32.totalorder %s140, %s143
    %p152 = scmp.eq.s32.totalorder %s16, 1
    %p153 = por %p151, %p152
    %p154 = scmp.ne.s32.totalorder %s143, %s144
    %p155 = scmp.eq.s32.totalorder %s16, 0
    %p156 = por %p154, %p155
    %p157 = scmp.ne.s32.totalorder %s143, %s144
    %p158 = scmp.eq.s32.totalorder %s17, 1
    %p159 = por %p157, %p158
    %p161 = scmp.ne.s32.totalorder %s144, %s160
    %p162 = scmp.eq.s32.totalorder %s17, 0
    %p163 = por %p161, %p162
    %p164 = scmp.le.s32.totalorder 1, %s11
    %p165 = scmp.lt.s32.totalorder %s11, 3
    %p166 = pnand %p164, %p165
    %p167 = pneg %p166
    // Predicated region
    $region9: #{upsampler_block.1} parent=5 // pred_check
      _
    $region10: #{upsampler_block.1} parent=5 // pred_check_branch
      %169 = sbr.rel (%p166) target = $region12
    $region11: #{upsampler_block.1} parent=5 // pred_region
      %s170 = ssub.s32 %s11, 1
      // Predicated region
      $region13: #{upsampler_block.1} parent=11 // pred_check
        %p171 = pneg %p72
      $region14: #{upsampler_block.1} parent=11 // pred_check_branch
        %173 = sbr.rel (%p171) target = $region16
      $region15: #{upsampler_block.1} parent=11 // pred_region
        _
      $region16: #{upsampler_block.1} parent=11 // pred_fallthru
        _
    $region12: #{upsampler_block.1} parent=5 // pred_fallthru
      _
    %p174 = scmp.lt.s32.totalorder %s11, 2
    // Predicated region
    $region17: #{upsampler_block.1} parent=5 // pred_check
      %p175 = pneg %p174
    $region18: #{upsampler_block.1} parent=5 // pred_check_branch
      %177 = sbr.rel (%p175) target = $region20
    $region19: #{upsampler_block.1} parent=5 // pred_region
      // Predicated region
      $region21: #{upsampler_block.1} parent=19 // pred_check
        %p178 = pneg %p45
      $region22: #{upsampler_block.1} parent=19 // pred_check_branch
        %180 = sbr.rel (%p178) target = $region24
      $region23: #{upsampler_block.1} parent=19 // pred_region
        %s181 = smul.u32 2, %s19
        %p182 = scmp.lt.s32.totalorder %s18, 1
        %s183 = scalar_select %p182, %s18, 1
        %p184 = scmp.lt.s32.totalorder %s181, 1
        %s185 = scalar_select %p184, %s181, 1
        %s186 = smul.addr %s183, 4
        %s187 = sadd.s32 %s185, %s186
        %s188 = smul.addr %s187, 8
        %s189 = scalar_lea.vmem %s0, %s188
        %s190 = smul.u32 2, %s19
      $region24: #{upsampler_block.1} parent=19 // pred_fallthru
        _
    $region20: #{upsampler_block.1} parent=5 // pred_fallthru
      _
    %p191 = scmp.le.s32.totalorder 1, %s11
    %p192 = scmp.lt.s32.totalorder %s11, 3
    %p193 = pnand %p191, %p192
    %p194 = pneg %p193
    // Predicated region
    $region25: #{upsampler_block.1} parent=5 // pred_check
      _
    $region26: #{upsampler_block.1} parent=5 // pred_check_branch
      %196 = sbr.rel (%p193) target = $region28
    $region27: #{upsampler_block.1} parent=5 // pred_region
      %s197 = ssub.s32 %s11, 1
      %s198 = smul.u32 2, %s21
      %p199 = scmp.lt.s32.totalorder %s20, 1
      %s200 = scalar_select %p199, %s20, 1
      %p201 = scmp.lt.s32.totalorder %s198, 1
      %s202 = scalar_select %p201, %s198, 1
      %s203 = smul.addr %s200, 4
      %s204 = sadd.s32 %s202, %s203
      %s205 = smul.addr %s204, 8
      %s206 = scalar_lea.vmem %s0, %s205
      %p207 = pneg %p51
      %p208 = pneg %p48
      %p209 = pneg %p72
      %p210 = pneg %p69
      %p211 = pneg %p100
      %p212 = pneg %p97
      %s213 = smul.u32 2, %s21
      %p214 = scmp.lt.s32.totalorder %s20, 1
      %s215 = scalar_select %p214, %s20, 1
      %p216 = scmp.lt.s32.totalorder %s213, 1
      %s217 = scalar_select %p216, %s213, 1
      %s218 = smul.addr %s215, 8
      %s219 = sadd.s32 %s217, %s218
      %s220 = smul.addr %s219, 8
      %s221 = scalar_lea.vmem %s2, %s220
      %p222 = pneg %p128
      %p223 = pneg %p125
      %p224 = scmp.lt.s32.totalorder %s20, 1
      %s225 = scalar_select %p224, %s20, 1
      %p226 = scmp.lt.s32.totalorder %s21, 0
      %s227 = scalar_select %p226, %s21, 0
      %s228 = smul.addr %s227, 4
      %s229 = smul.addr %s225, 4
      %s230 = sadd.s32 %s228, %s229
      %s231 = smul.addr %s230, 8
      %s232 = scalar_lea.vmem %s3, %s231
      %p233 = pneg %p156
      %p234 = pneg %p153
      %p235 = scmp.lt.s32.totalorder %s20, 1
      %s236 = scalar_select %p235, %s20, 1
      %p237 = scmp.lt.s32.totalorder %s21, 0
      %s238 = scalar_select %p237, %s21, 0
      %s239 = smul.addr %s238, 4
      %s240 = smul.addr %s236, 4
      %s241 = sadd.s32 %s239, %s240
      %s242 = smul.addr %s241, 8
      %s243 = scalar_lea.vmem %s4, %s242
      %s244 = smul.u32 2, %s21
      %p245 = scmp.lt.s32.totalorder %s20, 1
      %s246 = scalar_select %p245, %s20, 1
      %p247 = scmp.lt.s32.totalorder %s244, 1
      %s248 = scalar_select %p247, %s244, 1
      %s249 = smul.addr %s246, 4
      %s250 = sadd.s32 %s248, %s249
      %s251 = smul.addr %s250, 8
      %s252 = scalar_lea.vmem %s0, %s251
      %s253 = smul.u32 2, %s21
      %s254 = smul.u32 2, %s21
      %p255 = scmp.lt.s32.totalorder %s20, 1
      %s256 = scalar_select %p255, %s20, 1
      %p257 = scmp.lt.s32.totalorder %s254, 1
      %s258 = scalar_select %p257, %s254, 1
      %s259 = smul.addr %s256, 8
      %s260 = sadd.s32 %s258, %s259
      %s261 = smul.addr %s260, 8
      %s262 = scalar_lea.vmem %s2, %s261
      %s263 = smul.u32 2, %s21
      %p264 = scmp.lt.s32.totalorder %s20, 1
      %s265 = scalar_select %p264, %s20, 1
      %p266 = scmp.lt.s32.totalorder %s21, 0
      %s267 = scalar_select %p266, %s21, 0
      %s268 = smul.addr %s267, 4
      %s269 = smul.addr %s265, 4
      %s270 = sadd.s32 %s268, %s269
      %s271 = smul.addr %s270, 8
      %s272 = scalar_lea.vmem %s3, %s271
      %p273 = scmp.lt.s32.totalorder %s20, 1
      %s274 = scalar_select %p273, %s20, 1
      %p275 = scmp.lt.s32.totalorder %s21, 0
      %s276 = scalar_select %p275, %s21, 0
      %s277 = smul.addr %s276, 4
      %s278 = smul.addr %s274, 4
      %s279 = sadd.s32 %s277, %s278
      %s280 = smul.addr %s279, 8
      %s281 = scalar_lea.vmem %s4, %s280
      %v282 = vld [vmem:[%s1] sm:$0xff]
      %v283 = vld [vmem:[%s1 + $0x8] sm:$0xff]
      %v284 = vld [vmem:[%s1 + $0x10] sm:$0xff]
      %v285 = vld [vmem:[%s1 + $0x18] sm:$0xff]
      %v286 = vld [vmem:[%s252] sm:$0xff]
      %v287 = vld [vmem:[%s252 + $0x8] sm:$0xff]
      %v288 = vld [vmem:[%s252 + $0x10] sm:$0xff]
      %v289 = vld [vmem:[%s252 + $0x18] sm:$0xff]
      %vm290 = vcmask 130048
      %v292 = vsel %vm290, %v282, 0
      %v295 = vsel %vm290, %v283, 0
      %v298 = vsel %vm290, %v284, 0
      %v301 = vsel %vm290, %v285, 0
      %303 = vmatprep.subr.mxu0 0.0
      %304 = vmatpush1.msra.mxu0 0.0
      %305 = vmatprep.subr.mxu0 0.0
      %306 = vmatpush1.msra.mxu0 0.0
      %307 = vmatprep.subr.mxu0 0.0
      %308 = vmatpush1.msra.mxu0 0.0
      %309 = vmatprep.subr.mxu0 0.0
      %310 = vmatpush1.msra.mxu0 0.0
      %311 = vmatprep.subr.mxu0 0.0
      %312 = vmatpush1.msra.mxu0 0.0
      %313 = vmatprep.subr.mxu0 0.0
      %314 = vmatpush1.msra.mxu0 0.0
      %315 = vmatprep.subr.mxu0 0.0
      %316 = vmatpush1.msra.mxu0 0.0
      %317 = vmatprep.subr.mxu0 0.0
      %318 = vmatpush1.msra.mxu0 0.0
      %319 = vmatprep.subr.mxu0 0.0
      %320 = vmatpush1.msra.mxu0 0.0
      %321 = vmatprep.subr.mxu0 0.0
      %322 = vmatpush1.msra.mxu0 0.0
      %323 = vmatprep.subr.mxu0 0.0
      %324 = vmatpush1.msra.mxu0 0.0
      %325 = vmatprep.subr.mxu0 0.0
      %326 = vmatpush1.msra.mxu0 0.0
      %327 = vmatprep.subr.mxu0 0.0
      %328 = vmatpush1.msra.mxu0 0.0
      %329 = vmatprep.subr.mxu0 0.0
      %330 = vmatpush1.msra.mxu0 0.0
      %331 = vmatprep.subr.mxu0 %v289
      %332 = vmatpush1.msra.mxu0 %v288
      %333 = vmatprep.subr.mxu0 %v287
      %334 = vmatpush1.msra.mxu0 %v286
      %335 = vmatprep.subr.mxu0 0.0
      %336 = vmatpush2.msra.mxu0 0.0
      %337 = vmatprep.subr.mxu0 0.0
      %338 = vmatpush2.msra.mxu0 0.0
      %339 = vmatprep.subr.mxu0 0.0
      %340 = vmatpush2.msra.mxu0 0.0
      %341 = vmatprep.subr.mxu0 0.0
      %342 = vmatpush2.msra.mxu0 0.0
      %343 = vmatprep.subr.mxu0 0.0
      %344 = vmatpush2.msra.mxu0 0.0
      %345 = vmatprep.subr.mxu0 0.0
      %346 = vmatpush2.msra.mxu0 0.0
      %347 = vmatprep.subr.mxu0 0.0
      %348 = vmatpush2.msra.mxu0 0.0
      %349 = vmatprep.subr.mxu0 0.0
      %350 = vmatpush2.msra.mxu0 0.0
      %351 = vmatprep.subr.mxu0 0.0
      %352 = vmatpush2.msra.mxu0 0.0
      %353 = vmatprep.subr.mxu0 0.0
      %354 = vmatpush2.msra.mxu0 0.0
      %355 = vmatprep.subr.mxu0 0.0
      %356 = vmatpush2.msra.mxu0 0.0
      %357 = vmatprep.subr.mxu0 0.0
      %358 = vmatpush2.msra.mxu0 0.0
      %359 = vmatprep.subr.mxu0 0.0
      %360 = vmatpush2.msra.mxu0 0.0
      %361 = vmatprep.subr.mxu0 0.0
      %362 = vmatpush2.msra.mxu0 0.0
      %363 = vmatprep.subr.mxu0 0.0
      %364 = vmatpush2.msra.mxu0 0.0
      %365 = vmatprep.subr.mxu0 0.0
      %366 = vmatpush2.msra.mxu0 0.0
      %367 = vmatprep.mubr.f32.mxu0 0.0
      %368 = vmatmul.mubr.f32.gmra.mxu0 %v292
      %v369 = vpop.f32.mrf.mxu0
      %v370 = vadd.f32 0.0, %v369
      %v371 = vpop.f32.mrf.mxu0
      %v372 = vadd.f32 0.0, %v371
      %373 = vmatprep.mubr.f32.mxu0 0.0
      %374 = vmatmul.mubr.f32.gmra.mxu0 %v295
      %v375 = vpop.f32.mrf.mxu0
      %v376 = vadd.f32 0.0, %v375
      %v377 = vpop.f32.mrf.mxu0
      %v378 = vadd.f32 0.0, %v377
      %379 = vmatprep.mubr.f32.mxu0 0.0
      %380 = vmatmul.mubr.f32.gmra.mxu0 %v298
      %v381 = vpop.f32.mrf.mxu0
      %v382 = vadd.f32 0.0, %v381
      %v383 = vpop.f32.mrf.mxu0
      %v384 = vadd.f32 0.0, %v383
      %385 = vmatprep.mubr.f32.mxu0 0.0
      %386 = vmatmul.mubr.f32.gmra.mxu0 %v301
      %v387 = vpop.f32.mrf.mxu0
      %v388 = vadd.f32 0.0, %v387
      %v389 = vpop.f32.mrf.mxu0
      %v390 = vadd.f32 0.0, %v389
      %391 = vdwg.mxu0
      %392 = vst [vmem:[%s262] sm:$0xff] %v370
      %393 = vst [vmem:[%s262 + $0x8] sm:$0xff] %v372
      %394 = vst [vmem:[%s262 + $0x10] sm:$0xff] %v376
      %395 = vst [vmem:[%s262 + $0x18] sm:$0xff] %v378
      %396 = vst [vmem:[%s262 + $0x20] sm:$0xff] %v382
      %397 = vst [vmem:[%s262 + $0x28] sm:$0xff] %v384
      %398 = vst [vmem:[%s262 + $0x30] sm:$0xff] %v388
      %399 = vst [vmem:[%s262 + $0x38] sm:$0xff] %v390
      %v400 = vadd.f32 %v370, %v372
      %401 = vadd.xlane.f32.xlu0 %v400
      %v402 = vpop.xlane.xlu0 %401
      %v403 = vadd.f32 %v376, %v378
      %404 = vadd.xlane.f32.xlu0 %v403
      %v405 = vpop.xlane.xlu0 %404
      %v406 = vadd.f32 %v382, %v384
      %407 = vadd.xlane.f32.xlu0 %v406
      %v408 = vpop.xlane.xlu0 %407
      %v409 = vadd.f32 %v388, %v390
      %410 = vadd.xlane.f32.xlu0 %v409
      %v411 = vpop.xlane.xlu0 %410
      %vm412 = vcmask 7168
      %413 = vst.msk [vmem:[%s272] sm:$0xff] %vm412, %v402
      %414 = vst.msk [vmem:[%s272 + $0x8] sm:$0xff] %vm412, %v405
      %415 = vst.msk [vmem:[%s272 + $0x10] sm:$0xff] %vm412, %v408
      %416 = vst.msk [vmem:[%s272 + $0x18] sm:$0xff] %vm412, %v411
      %v417 = vmul.f32 %v370, %v370
      %v418 = vmul.f32 %v372, %v372
      %v419 = vmul.f32 %v376, %v376
      %v420 = vmul.f32 %v378, %v378
      %v421 = vmul.f32 %v382, %v382
      %v422 = vmul.f32 %v384, %v384
      %v423 = vmul.f32 %v388, %v388
      %v424 = vmul.f32 %v390, %v390
      %v425 = vadd.f32 %v417, %v418
      %426 = vadd.xlane.f32.xlu0 %v425
      %v427 = vpop.xlane.xlu0 %426
      %v428 = vadd.f32 %v419, %v420
      %429 = vadd.xlane.f32.xlu0 %v428
      %v430 = vpop.xlane.xlu0 %429
      %v431 = vadd.f32 %v421, %v422
      %432 = vadd.xlane.f32.xlu0 %v431
      %v433 = vpop.xlane.xlu0 %432
      %v434 = vadd.f32 %v423, %v424
      %435 = vadd.xlane.f32.xlu0 %v434
      %v436 = vpop.xlane.xlu0 %435
      %437 = vst.msk [vmem:[%s281] sm:$0xff] %vm412, %v427
      %438 = vst.msk [vmem:[%s281 + $0x8] sm:$0xff] %vm412, %v430
      %439 = vst.msk [vmem:[%s281 + $0x10] sm:$0xff] %vm412, %v433
      %440 = vst.msk [vmem:[%s281 + $0x18] sm:$0xff] %vm412, %v436
      %s441 = smul.u32 2, %s21
      %p442 = scmp.lt.s32.totalorder %s20, 1
      %s443 = scalar_select %p442, %s20, 1
      %p444 = scmp.lt.s32.totalorder %s441, 1
      %s445 = scalar_select %p444, %s441, 1
      %s446 = smul.addr %s443, 8
      %s447 = sadd.s32 %s445, %s446
      %s448 = smul.addr %s447, 8
      %s449 = scalar_lea.vmem %s2, %s448
      %p450 = scmp.lt.s32.totalorder %s20, 1
      %s451 = scalar_select %p450, %s20, 1
      %p452 = scmp.lt.s32.totalorder %s21, 0
      %s453 = scalar_select %p452, %s21, 0
      %s454 = smul.addr %s453, 4
      %s455 = smul.addr %s451, 4
      %s456 = sadd.s32 %s454, %s455
      %s457 = smul.addr %s456, 8
      %s458 = scalar_lea.vmem %s3, %s457
      %p459 = scmp.lt.s32.totalorder %s20, 1
      %s460 = scalar_select %p459, %s20, 1
      %p461 = scmp.lt.s32.totalorder %s21, 0
      %s462 = scalar_select %p461, %s21, 0
      %s463 = smul.addr %s462, 4
      %s464 = smul.addr %s460, 4
      %s465 = sadd.s32 %s463, %s464
      %s466 = smul.addr %s465, 8
      %s467 = scalar_lea.vmem %s4, %s466
      // Predicated region
      $region29: #{upsampler_block.1} parent=27 // pred_check
        %p468 = pneg %p97
      $region30: #{upsampler_block.1} parent=27 // pred_check_branch
        %470 = sbr.rel (%p468) target = $region32
      $region31: #{upsampler_block.1} parent=27 // pred_region
        %s471 = smul.u32 2, %s21
      $region32: #{upsampler_block.1} parent=27 // pred_fallthru
        _
      // Predicated region
      $region33: #{upsampler_block.1} parent=27 // pred_check
        %p472 = pneg %p125
      $region34: #{upsampler_block.1} parent=27 // pred_check_branch
        %474 = sbr.rel (%p472) target = $region36
      $region35: #{upsampler_block.1} parent=27 // pred_region
        _
      $region36: #{upsampler_block.1} parent=27 // pred_fallthru
        _
      // Predicated region
      $region37: #{upsampler_block.1} parent=27 // pred_check
        %p475 = pneg %p153
      $region38: #{upsampler_block.1} parent=27 // pred_check_branch
        %477 = sbr.rel (%p475) target = $region40
      $region39: #{upsampler_block.1} parent=27 // pred_region
        _
      $region40: #{upsampler_block.1} parent=27 // pred_fallthru
        _
    $region28: #{upsampler_block.1} parent=5 // pred_fallthru
      _
    %p478 = scmp.le.s32.totalorder 2, %s11
    // Predicated region
    $region41: #{upsampler_block.1} parent=5 // pred_check
      %p479 = pneg %p478
    $region42: #{upsampler_block.1} parent=5 // pred_check_branch
      %481 = sbr.rel (%p479) target = $region44
    $region43: #{upsampler_block.1} parent=5 // pred_region
      %s482 = ssub.s32 %s11, 2
      // Predicated region
      $region45: #{upsampler_block.1} parent=43 // pred_check
        %p483 = pneg %p103
      $region46: #{upsampler_block.1} parent=43 // pred_check_branch
        %485 = sbr.rel (%p483) target = $region48
      $region47: #{upsampler_block.1} parent=43 // pred_region
        %s486 = smul.u32 2, %s23
        %p487 = scmp.lt.s32.totalorder %s22, 1
        %s488 = scalar_select %p487, %s22, 1
        %p489 = scmp.lt.s32.totalorder %s486, 1
        %s490 = scalar_select %p489, %s486, 1
        %s491 = smul.addr %s488, 8
        %s492 = sadd.s32 %s490, %s491
        %s493 = smul.addr %s492, 8
        %s494 = scalar_lea.vmem %s2, %s493
      $region48: #{upsampler_block.1} parent=43 // pred_fallthru
        _
      // Predicated region
      $region49: #{upsampler_block.1} parent=43 // pred_check
        %p495 = pneg %p131
      $region50: #{upsampler_block.1} parent=43 // pred_check_branch
        %497 = sbr.rel (%p495) target = $region52
      $region51: #{upsampler_block.1} parent=43 // pred_region
        %p498 = scmp.lt.s32.totalorder %s22, 1
        %s499 = scalar_select %p498, %s22, 1
        %p500 = scmp.lt.s32.totalorder %s23, 0
        %s501 = scalar_select %p500, %s23, 0
        %s502 = smul.addr %s501, 4
        %s503 = smul.addr %s499, 4
        %s504 = sadd.s32 %s502, %s503
        %s505 = smul.addr %s504, 8
        %s506 = scalar_lea.vmem %s3, %s505
      $region52: #{upsampler_block.1} parent=43 // pred_fallthru
        _
      // Predicated region
      $region53: #{upsampler_block.1} parent=43 // pred_check
        %p507 = pneg %p159
      $region54: #{upsampler_block.1} parent=43 // pred_check_branch
        %509 = sbr.rel (%p507) target = $region56
      $region55: #{upsampler_block.1} parent=43 // pred_region
        %p510 = scmp.lt.s32.totalorder %s22, 1
        %s511 = scalar_select %p510, %s22, 1
        %p512 = scmp.lt.s32.totalorder %s23, 0
        %s513 = scalar_select %p512, %s23, 0
        %s514 = smul.addr %s513, 4
        %s515 = smul.addr %s511, 4
        %s516 = sadd.s32 %s514, %s515
        %s517 = smul.addr %s516, 8
        %s518 = scalar_lea.vmem %s4, %s517
      $region56: #{upsampler_block.1} parent=43 // pred_fallthru
        _
    $region44: #{upsampler_block.1} parent=5 // pred_fallthru
      _
  $region6: #{upsampler_block.1} parent=0 // loop_footer
    %s15 = sadd.s32 1, %s11
  $region7: #{upsampler_block.1} parent=0 // loop_footer_branch
    %10 = sbr.rel target = $region3
  $region8: #{upsampler_block.1} parent=0 // loop_exit
    _

</llo_original>
